<compile_context>
chip_gen: v7x
topology: tpu7x:2x2x1
jax: 0.10.0
libtpu: 0.0.40
codegen_flags: <defaults>
</compile_context>

<pallas_src>
import functools
import math

import jax
import jax.numpy as jnp
from jax.experimental import pallas as pl
from jax.experimental.pallas import tpu as pltpu


def _round_up(n, m):
    return ((n + m - 1) // m) * m


def _self_attention_kernel(x_ref, w_ref, o_ref, *, scale):
    # x_ref: (Bt, Sp, Dp), w_ref: (Dp, 3*Dp) fused pre-transposed weights,
    # o_ref: (Bt, Sp, Dp).
    Bt, Sp, Dp = x_ref.shape

    # Fused QKV projection: flatten (Bt, Sp) so the MXU sees Bt*Sp rows.
    x2 = x_ref[...].reshape(Bt * Sp, Dp)
    qkv = jnp.dot(x2, w_ref[...], preferred_element_type=jnp.float32)  # (Bt*Sp, 3*Dp)
    qkv = qkv.reshape(Bt, Sp, 3 * Dp)

    q = qkv[:, :, 0:Dp]           # (Bt, Sp, Dp)
    k = qkv[:, :, Dp:2 * Dp]
    v = qkv[:, :, 2 * Dp:3 * Dp]

    # score = q @ k^T / sqrt(dim)   (batched; contraction on last dims, no transpose)
    score = jnp.einsum("bqd,bkd->bqk", q, k,
                       preferred_element_type=jnp.float32) * scale

    # Reference calls torch.softmax(score, -1) but discards the result, so we
    # intentionally do NOT apply softmax.

    out = jnp.einsum("bqk,bkd->bqd", score, v,
                     preferred_element_type=jnp.float32)
    o_ref[...] = out.astype(o_ref.dtype)


def self_attention(x, wq, wk, wv, *, block_b=None):
    """x: (B, S, D); wq/wk/wv: (D, D) in nn.Linear (out, in) layout."""
    B, S, D = x.shape
    dtype = x.dtype
    scale = 1.0 / math.sqrt(D)  # reference uses sqrt(q.shape[2]) == sqrt(dim)

    # Lane/sublane-friendly padded sizes.
    Dp = _round_up(max(D, 128), 128)
    Sp = _round_up(max(S, 8), 8)

    # Fused, pre-transposed, zero-padded weight: applied as x @ Wcat (== x @ W^T).
    def _pad_wT(w):
        return jnp.zeros((Dp, Dp), dtype).at[:D, :D].set(jnp.asarray(w, dtype).T)

    wcat = jnp.concatenate([_pad_wT(wq), _pad_wT(wk), _pad_wT(wv)], axis=1)  # (Dp, 3*Dp)

    # Batches per grid step: aim for >= ~128 rows into the projection matmul.
    if block_b is None:
        block_b = max(1, min(B, -(-128 // Sp)))
    Bp = _round_up(B, block_b)

    # Zero padding is exact for this (softmax-free) computation.
    x_p = jnp.zeros((Bp, Sp, Dp), dtype).at[:B, :S, :D].set(x)

    kernel = functools.partial(_self_attention_kernel, scale=scale)

    out_p = pl.pallas_call(
        kernel,
        out_shape=jax.ShapeDtypeStruct((Bp, Sp, Dp), dtype),
        grid_spec=pltpu.PrefetchScalarGridSpec(
            num_scalar_prefetch=0,
            grid=(Bp // block_b,),
            in_specs=[
                pl.BlockSpec((block_b, Sp, Dp), lambda b: (b, 0, 0)),  # x tile
                pl.BlockSpec((Dp, 3 * Dp), lambda b: (0, 0)),          # fused weights (resident)
            ],
            out_specs=pl.BlockSpec((block_b, Sp, Dp), lambda b: (b, 0, 0)),
        ),
        compiler_params=pltpu.CompilerParams(
            dimension_semantics=("parallel",),
        ),
    )(x_p, wcat)

    return out_p[:B, :S, :D]


def _reference(x, wq, wk, wv):
    q = jnp.einsum("bsd,ed->bse", x, wq)
    k = jnp.einsum("bsd,ed->bse", x, wk)
    v = jnp.einsum("bsd,ed->bse", x, wv)
    score = jnp.einsum("bqd,bkd->bqk", q, k) / math.sqrt(q.shape[2])
    return jnp.einsum("bqk,bkd->bqd", score, v)


if __name__ == "__main__":
    B, S, D = 2, 8, 32  # (batch, seq, dim)

    key = jax.random.PRNGKey(0)
    kx, kq, kk, kv = jax.random.split(key, 4)

    x = jax.random.normal(kx, (B, S, D), dtype=jnp.float32)

    # nn.Linear-style init: U(-1/sqrt(dim), 1/sqrt(dim)), shape (out, in).
    bound = 1.0 / math.sqrt(D)
    wq = jax.random.uniform(kq, (D, D), jnp.float32, -bound, bound)
    wk = jax.random.uniform(kk, (D, D), jnp.float32, -bound, bound)
    wv = jax.random.uniform(kv, (D, D), jnp.float32, -bound, bound)

    out = self_attention(x, wq, wk, wv)
    out = jax.block_until_ready(out)

    ref = _reference(x, wq, wk, wv)
    assert out.shape == (B, S, D)
    assert jnp.allclose(out, ref, atol=1e-4, rtol=1e-4), "mismatch vs JAX reference"

    # TODO(synk): optional `mask` argument of forward() not implemented (default mask=None path only).
    print("KERNEL_OK")
</pallas_src>

<mosaic_0001>
module attributes {stable_mosaic.version = 11 : i64} {
  func.func @_self_attention_kernel(%arg0: i32, %arg1: memref<2x8x128xf32, #tpu.memory_space<vmem>>, %arg2: memref<128x384xf32, #tpu.memory_space<vmem>>, %arg3: memref<2x8x128xf32, #tpu.memory_space<vmem>>) attributes {dimension_semantics = [#tpu.dimension_semantics<parallel>], iteration_bounds = array<i64: 1>, scalar_prefetch = 0 : i64, scratch_operands = 0 : i64, tpu.core_type = #tpu.core_type<tc>, window_params = [{transform_indices = @transform_0, window_bounds = array<i64: 2, 8, 128>}, {pipeline_mode = #tpu.pipeline_mode<synchronous>, transform_indices = @transform_1, window_bounds = array<i64: 128, 384>}, {transform_indices = @transform_2, window_bounds = array<i64: 2, 8, 128>}]} {
    %c0 = arith.constant 0 : index
    %c0_0 = arith.constant 0 : index
    %c0_1 = arith.constant 0 : index
    %0 = vector.load %arg1[%c0, %c0_0, %c0_1] : memref<2x8x128xf32, #tpu.memory_space<vmem>>, vector<2x8x128xf32>
    %1 = vector.shape_cast %0 : vector<2x8x128xf32> to vector<16x128xf32>
    %c0_2 = arith.constant 0 : index
    %c0_3 = arith.constant 0 : index
    %2 = vector.load %arg2[%c0_2, %c0_3] : memref<128x384xf32, #tpu.memory_space<vmem>>, vector<128x384xf32>
    %cst = arith.constant dense<0.000000e+00> : vector<16x384xf32>
    %3 = tpu.matmul %1, %2, %cst {dimension_numbers = #tpu.dot_dimension_numbers<[1], [0], [0], [1], [0, 0, 1, 1], [], []>} : vector<16x128xf32>, vector<128x384xf32>, vector<16x384xf32> -> vector<16x384xf32>
    %4 = vector.shape_cast %3 : vector<16x384xf32> to vector<2x8x384xf32>
    %5 = vector.extract_strided_slice %4 {offsets = [0, 0, 0], sizes = [2, 8, 128], strides = [1, 1, 1]} : vector<2x8x384xf32> to vector<2x8x128xf32>
    %6 = vector.extract_strided_slice %4 {offsets = [0, 0, 128], sizes = [2, 8, 128], strides = [1, 1, 1]} : vector<2x8x384xf32> to vector<2x8x128xf32>
    %7 = vector.extract_strided_slice %4 {offsets = [0, 0, 256], sizes = [2, 8, 128], strides = [1, 1, 1]} : vector<2x8x384xf32> to vector<2x8x128xf32>
    "tpu.trace_start"() <{level = 10 : i32, message = "bqd,bkd->bqk"}> : () -> ()
    %cst_4 = arith.constant dense<0.000000e+00> : vector<2x8x8xf32>
    %8 = tpu.matmul %5, %6, %cst_4 {dimension_numbers = #tpu.dot_dimension_numbers<[2], [2], [1], [1], [0, 0, 0, 1, 1, 1], [0], [0]>} : vector<2x8x128xf32>, vector<2x8x128xf32>, vector<2x8x8xf32> -> vector<2x8x8xf32>
    "tpu.trace_stop"() : () -> ()
    %cst_5 = arith.constant 0.176776692 : f32
    %9 = vector.broadcast %cst_5 : f32 to vector<2x8x8xf32>
    %10 = arith.mulf %8, %9 : vector<2x8x8xf32>
    "tpu.trace_start"() <{level = 10 : i32, message = "bqk,bkd->bqd"}> : () -> ()
    %cst_6 = arith.constant dense<0.000000e+00> : vector<2x8x128xf32>
    %11 = tpu.matmul %10, %7, %cst_6 {dimension_numbers = #tpu.dot_dimension_numbers<[2], [1], [1], [2], [0, 0, 0, 1, 1, 2], [0], [0]>} : vector<2x8x8xf32>, vector<2x8x128xf32>, vector<2x8x128xf32> -> vector<2x8x128xf32>
    "tpu.trace_stop"() : () -> ()
    %c0_7 = arith.constant 0 : index
    %c0_8 = arith.constant 0 : index
    %c0_9 = arith.constant 0 : index
    %12 = vector.load %arg3[%c0_7, %c0_8, %c0_9] : memref<2x8x128xf32, #tpu.memory_space<vmem>>, vector<2x8x128xf32>
    tpu.vector_store %arg3[%c0_7, %c0_8, %c0_9], %11 {strides = array<i32>} : memref<2x8x128xf32, #tpu.memory_space<vmem>>, vector<2x8x128xf32>,
    return
  }
  func.func @transform_0(%arg0: i32) -> (i32, i32, i32) {
    %c0_i32 = arith.constant 0 : i32
    %c0_i32_0 = arith.constant 0 : i32
    %c0_i32_1 = arith.constant 0 : i32
    return %arg0, %c0_i32, %c0_i32_0 : i32, i32, i32
  }
  func.func @transform_1(%arg0: i32) -> (i32, i32) {
    %c0_i32 = arith.constant 0 : i32
    %c0_i32_0 = arith.constant 0 : i32
    %c0_i32_1 = arith.constant 0 : i32
    return %c0_i32, %c0_i32_0 : i32, i32
  }
  func.func @transform_2(%arg0: i32) -> (i32, i32, i32) {
    %c0_i32 = arith.constant 0 : i32
    %c0_i32_0 = arith.constant 0 : i32
    %c0_i32_1 = arith.constant 0 : i32
    return %arg0, %c0_i32, %c0_i32_0 : i32, i32, i32
  }
}

</mosaic_0001>

<llo_original>
// kernel: tpu_custom_call.1
$region0: #{tpu_custom_call.1}
  #allocation0 [shape = 'u32[]', space=smem, size = 0x4, offset = 0x4, fixed_abs, tag = 'smem constant byte address 0x4 - core index']
  #allocation1 [shape = 'u32[144,128]{1,0:T(1,128)}', space=vmem, size = 0x12000, scoped, tag = 'internal scratch']
  %s0 = inlined_call_operand.hbm [shape: f32[2,8,128], index: 0, kind: input, shape index: {}]
  %s1 = inlined_call_operand.hbm [shape: f32[128,384], index: 1, kind: input, shape index: {}]
  %s2 = inlined_call_operand.hbm [shape: f32[2,8,128], index: 2, kind: output, shape index: {}]
  %s3 = sld [smem:[#allocation0]]
  $region26: #{tpu_custom_call.1} parent=0
    _
  %s5 = ssub.s32 1, %s3
  %s6 = scalar_select 0, %s5, %s3
  $region1: #{tpu_custom_call.1} parent=0
    #allocation2 [shape = 'u8[8192]{0}', space=vmem, size = 0x2000, scoped, tag = 'input window, operand 0, single buffered']
    #allocation3 [shape = 's32[1]{0}', space=sflag, size = 0x4, scoped, tag = 'scoped memory for tpu_custom_call.1']
    #allocation4 [shape = 's32[1]{0}', space=sflag, size = 0x4, scoped, tag = 'scoped memory for tpu_custom_call.1']
    #allocation5 [shape = 'u8[196608]{0}', space=vmem, size = 0x30000, scoped, tag = 'input window, operand 1, single buffered']
    #allocation6 [shape = 's32[1]{0}', space=sflag, size = 0x4, scoped, tag = 'scoped memory for tpu_custom_call.1']
    #allocation7 [shape = 'u8[8192]{0}', space=vmem, size = 0x2000, scoped, tag = 'output window, operand 0, single buffered']
    %7 = vsyncpa [#allocation3], 0
    %8 = vsyncpa [#allocation6], 0
    %9 = vsyncpa [#allocation4], 0
    // Predicated region
    $region2: #{tpu_custom_call.1} parent=1 // pred_check
      _
    $region3: #{tpu_custom_call.1} parent=1 // pred_check_branch
      %11 = sbr.rel (0) target = $region5
    $region4: #{tpu_custom_call.1} parent=1 // pred_region
      %s13 = ssub.s32 256, 256
      %14 = vsyncadd [#allocation3], %s13
      %s15 = sshll.u32 [#allocation2], 4
      %s16 = int_to_ptr.vmem [resolvable:$true] %s15
      %21 = dma.hbm_to_vmem [thread:$0]  %s0, 256, %s16, [#allocation3], 128, 128, 8
    $region5: #{tpu_custom_call.1} parent=1 // pred_fallthru
      _
    // Predicated region
    $region6: #{tpu_custom_call.1} parent=1 // pred_check
      _
    $region7: #{tpu_custom_call.1} parent=1 // pred_check_branch
      %23 = sbr.rel (0) target = $region9
    $region8: #{tpu_custom_call.1} parent=1 // pred_region
      %s25 = ssub.s32 6144, 6144
      %26 = vsyncadd [#allocation6], %s25
      %s27 = sshll.u32 [#allocation5], 4
      %s28 = int_to_ptr.vmem [resolvable:$true] %s27
      %33 = dma.hbm_to_vmem [thread:$0]  %s1, 6144, %s28, [#allocation6], 384, 384, 24
    $region9: #{tpu_custom_call.1} parent=1 // pred_fallthru
      _
    // Predicated region
    $region10: #{tpu_custom_call.1} parent=1 // pred_check
      _
    $region11: #{tpu_custom_call.1} parent=1 // pred_check_branch
      %35 = sbr.rel (0) target = $region13
    $region12: #{tpu_custom_call.1} parent=1 // pred_region
      %36 = dma.done [#allocation3], 256
    $region13: #{tpu_custom_call.1} parent=1 // pred_fallthru
      _
    // Predicated region
    $region14: #{tpu_custom_call.1} parent=1 // pred_check
      _
    $region15: #{tpu_custom_call.1} parent=1 // pred_check_branch
      %38 = sbr.rel (0) target = $region17
    $region16: #{tpu_custom_call.1} parent=1 // pred_region
      %39 = dma.done [#allocation6], 6144
    $region17: #{tpu_custom_call.1} parent=1 // pred_fallthru
      _
    %v40 = vld [vmem:[#allocation2] sm:$0xff]
    %v41 = vld [vmem:[#allocation2 + $0x8] sm:$0xff]
    %v42 = vld [vmem:[#allocation5] sm:$0xff]
    %v43 = vld [vmem:[#allocation5 + $0x8] sm:$0xff]
    %v44 = vld [vmem:[#allocation5 + $0x10] sm:$0xff]
    %v45 = vld [vmem:[#allocation5 + $0x18] sm:$0xff]
    %v46 = vld [vmem:[#allocation5 + $0x20] sm:$0xff]
    %v47 = vld [vmem:[#allocation5 + $0x28] sm:$0xff]
    %v48 = vld [vmem:[#allocation5 + $0x30] sm:$0xff]
    %v49 = vld [vmem:[#allocation5 + $0x38] sm:$0xff]
    %v50 = vld [vmem:[#allocation5 + $0x40] sm:$0xff]
    %v51 = vld [vmem:[#allocation5 + $0x48] sm:$0xff]
    %v52 = vld [vmem:[#allocation5 + $0x50] sm:$0xff]
    %v53 = vld [vmem:[#allocation5 + $0x58] sm:$0xff]
    %v54 = vld [vmem:[#allocation5 + $0x60] sm:$0xff]
    %v55 = vld [vmem:[#allocation5 + $0x68] sm:$0xff]
    %v56 = vld [vmem:[#allocation5 + $0x70] sm:$0xff]
    %v57 = vld [vmem:[#allocation5 + $0x78] sm:$0xff]
    %v58 = vld [vmem:[#allocation5 + $0x80] sm:$0xff]
    %v59 = vld [vmem:[#allocation5 + $0x88] sm:$0xff]
    %v60 = vld [vmem:[#allocation5 + $0x90] sm:$0xff]
    %v61 = vld [vmem:[#allocation5 + $0x98] sm:$0xff]
    %v62 = vld [vmem:[#allocation5 + $0xa0] sm:$0xff]
    %v63 = vld [vmem:[#allocation5 + $0xa8] sm:$0xff]
    %v64 = vld [vmem:[#allocation5 + $0xb0] sm:$0xff]
    %v65 = vld [vmem:[#allocation5 + $0xb8] sm:$0xff]
    %v66 = vld [vmem:[#allocation5 + $0xc0] sm:$0xff]
    %v67 = vld [vmem:[#allocation5 + $0xc8] sm:$0xff]
    %v68 = vld [vmem:[#allocation5 + $0xd0] sm:$0xff]
    %v69 = vld [vmem:[#allocation5 + $0xd8] sm:$0xff]
    %v70 = vld [vmem:[#allocation5 + $0xe0] sm:$0xff]
    %v71 = vld [vmem:[#allocation5 + $0xe8] sm:$0xff]
    %v72 = vld [vmem:[#allocation5 + $0xf0] sm:$0xff]
    %v73 = vld [vmem:[#allocation5 + $0xf8] sm:$0xff]
    %v74 = vld [vmem:[#allocation5 + $0x100] sm:$0xff]
    %v75 = vld [vmem:[#allocation5 + $0x108] sm:$0xff]
    %v76 = vld [vmem:[#allocation5 + $0x110] sm:$0xff]
    %v77 = vld [vmem:[#allocation5 + $0x118] sm:$0xff]
    %v78 = vld [vmem:[#allocation5 + $0x120] sm:$0xff]
    %v79 = vld [vmem:[#allocation5 + $0x128] sm:$0xff]
    %v80 = vld [vmem:[#allocation5 + $0x130] sm:$0xff]
    %v81 = vld [vmem:[#allocation5 + $0x138] sm:$0xff]
    %v82 = vld [vmem:[#allocation5 + $0x140] sm:$0xff]
    %v83 = vld [vmem:[#allocation5 + $0x148] sm:$0xff]
    %v84 = vld [vmem:[#allocation5 + $0x150] sm:$0xff]
    %v85 = vld [vmem:[#allocation5 + $0x158] sm:$0xff]
    %v86 = vld [vmem:[#allocation5 + $0x160] sm:$0xff]
    %v87 = vld [vmem:[#allocation5 + $0x168] sm:$0xff]
    %v88 = vld [vmem:[#allocation5 + $0x170] sm:$0xff]
    %v89 = vld [vmem:[#allocation5 + $0x178] sm:$0xff]
    %90 = vmatprep.subr.mxu0 %v43
    %91 = vmatpush1.msra.mxu0 %v42
    %92 = vmatprep.subr.mxu0 %v46
    %93 = vmatpush1.msra.mxu0 %v45
    %94 = vmatprep.subr.mxu0 %v49
    %95 = vmatpush1.msra.mxu0 %v48
    %96 = vmatprep.subr.mxu0 %v52
    %97 = vmatpush1.msra.mxu0 %v51
    %98 = vmatprep.subr.mxu0 %v55
    %99 = vmatpush1.msra.mxu0 %v54
    %100 = vmatprep.subr.mxu0 %v58
    %101 = vmatpush1.msra.mxu0 %v57
    %102 = vmatprep.subr.mxu0 %v61
    %103 = vmatpush1.msra.mxu0 %v60
    %104 = vmatprep.subr.mxu0 %v64
    %105 = vmatpush1.msra.mxu0 %v63
    %106 = vmatprep.subr.mxu0 %v67
    %107 = vmatpush1.msra.mxu0 %v66
    %108 = vmatprep.subr.mxu0 %v70
    %109 = vmatpush1.msra.mxu0 %v69
    %110 = vmatprep.subr.mxu0 %v73
    %111 = vmatpush1.msra.mxu0 %v72
    %112 = vmatprep.subr.mxu0 %v76
    %113 = vmatpush1.msra.mxu0 %v75
    %114 = vmatprep.subr.mxu0 %v79
    %115 = vmatpush1.msra.mxu0 %v78
    %116 = vmatprep.subr.mxu0 %v82
    %117 = vmatpush1.msra.mxu0 %v81
    %118 = vmatprep.subr.mxu0 %v85
    %119 = vmatpush1.msra.mxu0 %v84
    %120 = vmatprep.subr.mxu0 %v88
    %121 = vmatpush1.msra.mxu0 %v87
    %122 = vmatprep.subr.mxu0 0.0
    %123 = vmatpush1.msra.mxu0 0.0
    %124 = vmatprep.subr.mxu0 0.0
    %125 = vmatpush1.msra.mxu0 0.0
    %126 = vmatprep.subr.mxu0 0.0
    %127 = vmatpush1.msra.mxu0 0.0
    %128 = vmatprep.subr.mxu0 0.0
    %129 = vmatpush1.msra.mxu0 0.0
    %130 = vmatprep.subr.mxu0 0.0
    %131 = vmatpush1.msra.mxu0 0.0
    %132 = vmatprep.subr.mxu0 0.0
    %133 = vmatpush1.msra.mxu0 0.0
    %134 = vmatprep.subr.mxu0 0.0
    %135 = vmatpush1.msra.mxu0 0.0
    %136 = vmatprep.subr.mxu0 0.0
    %137 = vmatpush1.msra.mxu0 0.0
    %138 = vmatprep.subr.mxu0 0.0
    %139 = vmatpush1.msra.mxu0 0.0
    %140 = vmatprep.subr.mxu0 0.0
    %141 = vmatpush1.msra.mxu0 0.0
    %142 = vmatprep.subr.mxu0 0.0
    %143 = vmatpush1.msra.mxu0 0.0
    %144 = vmatprep.subr.mxu0 0.0
    %145 = vmatpush1.msra.mxu0 0.0
    %146 = vmatprep.subr.mxu0 0.0
    %147 = vmatpush1.msra.mxu0 0.0
    %148 = vmatprep.subr.mxu0 0.0
    %149 = vmatpush1.msra.mxu0 0.0
    %150 = vmatprep.subr.mxu0 0.0
    %151 = vmatpush1.msra.mxu0 0.0
    %152 = vmatprep.subr.mxu0 0.0
    %153 = vmatpush1.msra.mxu0 0.0
    %154 = vmatprep.mubr.f32.mxu0 0.0
    %155 = vmatmul.mubr.f32.gmra.mrb[0].mxu0 %v40
    %v156 = vpop.f32.mrb[0].mxu0
    %v157 = vadd.f32 0.0, %v156
    %v158 = vpop.f32.mrb[0].mxu0
    %v159 = vadd.f32 0.0, %v158
    %160 = vmatprep.mubr.f32.mxu0 0.0
    %161 = vmatmul.mubr.f32.gmra.mrb[0].mxu0 %v41
    %v162 = vpop.f32.mrb[0].mxu0
    %v163 = vadd.f32 0.0, %v162
    %v164 = vpop.f32.mrb[0].mxu0
    %v165 = vadd.f32 0.0, %v164
    %166 = vdwg.mxu0
    %167 = vmatprep.subr.mxu0 0.0
    %168 = vmatpush1.msra.mxu0 %v44
    %169 = vmatprep.subr.mxu0 0.0
    %170 = vmatpush1.msra.mxu0 %v47
    %171 = vmatprep.subr.mxu0 0.0
    %172 = vmatpush1.msra.mxu0 %v50
    %173 = vmatprep.subr.mxu0 0.0
    %174 = vmatpush1.msra.mxu0 %v53
    %175 = vmatprep.subr.mxu0 0.0
    %176 = vmatpush1.msra.mxu0 %v56
    %177 = vmatprep.subr.mxu0 0.0
    %178 = vmatpush1.msra.mxu0 %v59
    %179 = vmatprep.subr.mxu0 0.0
    %180 = vmatpush1.msra.mxu0 %v62
    %181 = vmatprep.subr.mxu0 0.0
    %182 = vmatpush1.msra.mxu0 %v65
    %183 = vmatprep.subr.mxu0 0.0
    %184 = vmatpush1.msra.mxu0 %v68
    %185 = vmatprep.subr.mxu0 0.0
    %186 = vmatpush1.msra.mxu0 %v71
    %187 = vmatprep.subr.mxu0 0.0
    %188 = vmatpush1.msra.mxu0 %v74
    %189 = vmatprep.subr.mxu0 0.0
    %190 = vmatpush1.msra.mxu0 %v77
    %191 = vmatprep.subr.mxu0 0.0
    %192 = vmatpush1.msra.mxu0 %v80
    %193 = vmatprep.subr.mxu0 0.0
    %194 = vmatpush1.msra.mxu0 %v83
    %195 = vmatprep.subr.mxu0 0.0
    %196 = vmatpush1.msra.mxu0 %v86
    %197 = vmatprep.subr.mxu0 0.0
    %198 = vmatpush1.msra.mxu0 %v89
    %199 = vmatprep.subr.mxu0 0.0
    %200 = vmatpush1.msra.mxu0 0.0
    %201 = vmatprep.subr.mxu0 0.0
    %202 = vmatpush1.msra.mxu0 0.0
    %203 = vmatprep.subr.mxu0 0.0
    %204 = vmatpush1.msra.mxu0 0.0
    %205 = vmatprep.subr.mxu0 0.0
    %206 = vmatpush1.msra.mxu0 0.0
    %207 = vmatprep.subr.mxu0 0.0
    %208 = vmatpush1.msra.mxu0 0.0
    %209 = vmatprep.subr.mxu0 0.0
    %210 = vmatpush1.msra.mxu0 0.0
    %211 = vmatprep.subr.mxu0 0.0
    %212 = vmatpush1.msra.mxu0 0.0
    %213 = vmatprep.subr.mxu0 0.0
    %214 = vmatpush1.msra.mxu0 0.0
    %215 = vmatprep.subr.mxu0 0.0
    %216 = vmatpush1.msra.mxu0 0.0
    %217 = vmatprep.subr.mxu0 0.0
    %218 = vmatpush1.msra.mxu0 0.0
    %219 = vmatprep.subr.mxu0 0.0
    %220 = vmatpush1.msra.mxu0 0.0
    %221 = vmatprep.subr.mxu0 0.0
    %222 = vmatpush1.msra.mxu0 0.0
    %223 = vmatprep.subr.mxu0 0.0
    %224 = vmatpush1.msra.mxu0 0.0
    %225 = vmatprep.subr.mxu0 0.0
    %226 = vmatpush1.msra.mxu0 0.0
    %227 = vmatprep.subr.mxu0 0.0
    %228 = vmatpush1.msra.mxu0 0.0
    %229 = vmatprep.subr.mxu0 0.0
    %230 = vmatpush1.msra.mxu0 0.0
    %231 = vmatprep.mubr.f32.mxu0 0.0
    %232 = vmatmul.mubr.f32.gmra.mrb[0].mxu0 %v40
    %v233 = vpop.f32.mrb[0].mxu0
    %v234 = vadd.f32 0.0, %v233
    %v235 = vpop.f32.mrb[0].mxu0
    %236 = vmatprep.mubr.f32.mxu0 0.0
    %237 = vmatmul.mubr.f32.gmra.mrb[0].mxu0 %v41
    %v238 = vpop.f32.mrb[0].mxu0
    %v239 = vadd.f32 0.0, %v238
    %v240 = vpop.f32.mrb[0].mxu0
    %241 = vdwg.mxu0
    %242 = vmatprep.subr.mxu0 0.0
    %243 = vmatpush1.xpose.msra.mxu0 %v159
    %244 = vmatprep.subr.mxu0 0.0
    %245 = vmatpush1.xpose.msra.mxu0 0.0
    %246 = vmatprep.subr.mxu0 0.0
    %247 = vmatpush1.xpose.msra.mxu0 0.0
    %248 = vmatprep.subr.mxu0 0.0
    %249 = vmatpush1.xpose.msra.mxu0 0.0
    %250 = vmatprep.subr.mxu0 0.0
    %251 = vmatpush1.xpose.msra.mxu0 0.0
    %252 = vmatprep.subr.mxu0 0.0
    %253 = vmatpush1.xpose.msra.mxu0 0.0
    %254 = vmatprep.subr.mxu0 0.0
    %255 = vmatpush1.xpose.msra.mxu0 0.0
    %256 = vmatprep.subr.mxu0 0.0
    %257 = vmatpush1.xpose.msra.mxu0 0.0
    %258 = vmatprep.subr.mxu0 0.0
    %259 = vmatpush1.xpose.msra.mxu0 0.0
    %260 = vmatprep.subr.mxu0 0.0
    %261 = vmatpush1.xpose.msra.mxu0 0.0
    %262 = vmatprep.subr.mxu0 0.0
    %263 = vmatpush1.xpose.msra.mxu0 0.0
    %264 = vmatprep.subr.mxu0 0.0
    %265 = vmatpush1.xpose.msra.mxu0 0.0
    %266 = vmatprep.subr.mxu0 0.0
    %267 = vmatpush1.xpose.msra.mxu0 0.0
    %268 = vmatprep.subr.mxu0 0.0
    %269 = vmatpush1.xpose.msra.mxu0 0.0
    %270 = vmatprep.subr.mxu0 0.0
    %271 = vmatpush1.xpose.msra.mxu0 0.0
    %272 = vmatprep.subr.mxu0 0.0
    %273 = vmatpush1.xpose.msra.mxu0 0.0
    %274 = vmatprep.subr.mxu0 0.0
    %275 = vmatpush1.xpose.msra.mxu0 0.0
    %276 = vmatprep.subr.mxu0 0.0
    %277 = vmatpush1.xpose.msra.mxu0 0.0
    %278 = vmatprep.subr.mxu0 0.0
    %279 = vmatpush1.xpose.msra.mxu0 0.0
    %280 = vmatprep.subr.mxu0 0.0
    %281 = vmatpush1.xpose.msra.mxu0 0.0
    %282 = vmatprep.subr.mxu0 0.0
    %283 = vmatpush1.xpose.msra.mxu0 0.0
    %284 = vmatprep.subr.mxu0 0.0
    %285 = vmatpush1.xpose.msra.mxu0 0.0
    %286 = vmatprep.subr.mxu0 0.0
    %287 = vmatpush1.xpose.msra.mxu0 0.0
    %288 = vmatprep.subr.mxu0 0.0
    %289 = vmatpush1.xpose.msra.mxu0 0.0
    %290 = vmatprep.subr.mxu0 0.0
    %291 = vmatpush1.xpose.msra.mxu0 0.0
    %292 = vmatprep.subr.mxu0 0.0
    %293 = vmatpush1.xpose.msra.mxu0 0.0
    %294 = vmatprep.subr.mxu0 0.0
    %295 = vmatpush1.xpose.msra.mxu0 0.0
    %296 = vmatprep.subr.mxu0 0.0
    %297 = vmatpush1.xpose.msra.mxu0 0.0
    %298 = vmatprep.subr.mxu0 0.0
    %299 = vmatpush1.xpose.msra.mxu0 0.0
    %300 = vmatprep.subr.mxu0 0.0
    %301 = vmatpush1.xpose.msra.mxu0 0.0
    %302 = vmatprep.subr.mxu0 0.0
    %303 = vmatpush1.xpose.msra.mxu0 0.0
    %304 = vmatprep.subr.mxu0 0.0
    %305 = vmatpush1.xpose.msra.mxu0 0.0
    %306 = vmatprep.mubr.f32.mxu0 0.0
    %307 = vmatmul.mubr.f32.gmra.mrb[0].mxu0 %v157
    %v308 = vpop.f32.mrb[0].mxu0
    %v309 = vadd.f32 0.0, %v308
    %v310 = vpop.f32.mrb[0].mxu0
    %311 = vdwg.mxu0
    %312 = vmatprep.subr.mxu0 0.0
    %313 = vmatpush1.xpose.msra.mxu0 %v165
    %314 = vmatprep.subr.mxu0 0.0
    %315 = vmatpush1.xpose.msra.mxu0 0.0
    %316 = vmatprep.subr.mxu0 0.0
    %317 = vmatpush1.xpose.msra.mxu0 0.0
    %318 = vmatprep.subr.mxu0 0.0
    %319 = vmatpush1.xpose.msra.mxu0 0.0
    %320 = vmatprep.subr.mxu0 0.0
    %321 = vmatpush1.xpose.msra.mxu0 0.0
    %322 = vmatprep.subr.mxu0 0.0
    %323 = vmatpush1.xpose.msra.mxu0 0.0
    %324 = vmatprep.subr.mxu0 0.0
    %325 = vmatpush1.xpose.msra.mxu0 0.0
    %326 = vmatprep.subr.mxu0 0.0
    %327 = vmatpush1.xpose.msra.mxu0 0.0
    %328 = vmatprep.subr.mxu0 0.0
    %329 = vmatpush1.xpose.msra.mxu0 0.0
    %330 = vmatprep.subr.mxu0 0.0
    %331 = vmatpush1.xpose.msra.mxu0 0.0
    %332 = vmatprep.subr.mxu0 0.0
    %333 = vmatpush1.xpose.msra.mxu0 0.0
    %334 = vmatprep.subr.mxu0 0.0
    %335 = vmatpush1.xpose.msra.mxu0 0.0
    %336 = vmatprep.subr.mxu0 0.0
    %337 = vmatpush1.xpose.msra.mxu0 0.0
    %338 = vmatprep.subr.mxu0 0.0
    %339 = vmatpush1.xpose.msra.mxu0 0.0
    %340 = vmatprep.subr.mxu0 0.0
    %341 = vmatpush1.xpose.msra.mxu0 0.0
    %342 = vmatprep.subr.mxu0 0.0
    %343 = vmatpush1.xpose.msra.mxu0 0.0
    %344 = vmatprep.subr.mxu0 0.0
    %345 = vmatpush1.xpose.msra.mxu0 0.0
    %346 = vmatprep.subr.mxu0 0.0
    %347 = vmatpush1.xpose.msra.mxu0 0.0
    %348 = vmatprep.subr.mxu0 0.0
    %349 = vmatpush1.xpose.msra.mxu0 0.0
    %350 = vmatprep.subr.mxu0 0.0
    %351 = vmatpush1.xpose.msra.mxu0 0.0
    %352 = vmatprep.subr.mxu0 0.0
    %353 = vmatpush1.xpose.msra.mxu0 0.0
    %354 = vmatprep.subr.mxu0 0.0
    %355 = vmatpush1.xpose.msra.mxu0 0.0
    %356 = vmatprep.subr.mxu0 0.0
    %357 = vmatpush1.xpose.msra.mxu0 0.0
    %358 = vmatprep.subr.mxu0 0.0
    %359 = vmatpush1.xpose.msra.mxu0 0.0
    %360 = vmatprep.subr.mxu0 0.0
    %361 = vmatpush1.xpose.msra.mxu0 0.0
    %362 = vmatprep.subr.mxu0 0.0
    %363 = vmatpush1.xpose.msra.mxu0 0.0
    %364 = vmatprep.subr.mxu0 0.0
    %365 = vmatpush1.xpose.msra.mxu0 0.0
    %366 = vmatprep.subr.mxu0 0.0
    %367 = vmatpush1.xpose.msra.mxu0 0.0
    %368 = vmatprep.subr.mxu0 0.0
    %369 = vmatpush1.xpose.msra.mxu0 0.0
    %370 = vmatprep.subr.mxu0 0.0
    %371 = vmatpush1.xpose.msra.mxu0 0.0
    %372 = vmatprep.subr.mxu0 0.0
    %373 = vmatpush1.xpose.msra.mxu0 0.0
    %374 = vmatprep.subr.mxu0 0.0
    %375 = vmatpush1.xpose.msra.mxu0 0.0
    %376 = vmatprep.mubr.f32.mxu0 0.0
    %377 = vmatmul.mubr.f32.gmra.mrb[0].mxu0 %v163
    %v378 = vpop.f32.mrb[0].mxu0
    %v379 = vadd.f32 0.0, %v378
    %v380 = vpop.f32.mrb[0].mxu0
    %381 = vdwg.mxu0
    %v382 = vmul.f32 %v309, 0.17677669
    %v383 = vmul.f32 %v379, 0.17677669
    %vm384 = vcmask 64512
    %v386 = vsel %vm384, %v382, 0
    %388 = vmatprep.subr.mxu0 0.0
    %389 = vmatpush1.msra.mxu0 %v234
    %390 = vmatprep.subr.mxu0 0.0
    %391 = vmatpush1.msra.mxu0 0.0
    %392 = vmatprep.subr.mxu0 0.0
    %393 = vmatpush1.msra.mxu0 0.0
    %394 = vmatprep.subr.mxu0 0.0
    %395 = vmatpush1.msra.mxu0 0.0
    %396 = vmatprep.subr.mxu0 0.0
    %397 = vmatpush1.msra.mxu0 0.0
    %398 = vmatprep.subr.mxu0 0.0
    %399 = vmatpush1.msra.mxu0 0.0
    %400 = vmatprep.subr.mxu0 0.0
    %401 = vmatpush1.msra.mxu0 0.0
    %402 = vmatprep.subr.mxu0 0.0
    %403 = vmatpush1.msra.mxu0 0.0
    %404 = vmatprep.subr.mxu0 0.0
    %405 = vmatpush1.msra.mxu0 0.0
    %406 = vmatprep.subr.mxu0 0.0
    %407 = vmatpush1.msra.mxu0 0.0
    %408 = vmatprep.subr.mxu0 0.0
    %409 = vmatpush1.msra.mxu0 0.0
    %410 = vmatprep.subr.mxu0 0.0
    %411 = vmatpush1.msra.mxu0 0.0
    %412 = vmatprep.subr.mxu0 0.0
    %413 = vmatpush1.msra.mxu0 0.0
    %414 = vmatprep.subr.mxu0 0.0
    %415 = vmatpush1.msra.mxu0 0.0
    %416 = vmatprep.subr.mxu0 0.0
    %417 = vmatpush1.msra.mxu0 0.0
    %418 = vmatprep.subr.mxu0 0.0
    %419 = vmatpush1.msra.mxu0 0.0
    %420 = vmatprep.subr.mxu0 0.0
    %421 = vmatpush1.msra.mxu0 0.0
    %422 = vmatprep.subr.mxu0 0.0
    %423 = vmatpush1.msra.mxu0 0.0
    %424 = vmatprep.subr.mxu0 0.0
    %425 = vmatpush1.msra.mxu0 0.0
    %426 = vmatprep.subr.mxu0 0.0
    %427 = vmatpush1.msra.mxu0 0.0
    %428 = vmatprep.subr.mxu0 0.0
    %429 = vmatpush1.msra.mxu0 0.0
    %430 = vmatprep.subr.mxu0 0.0
    %431 = vmatpush1.msra.mxu0 0.0
    %432 = vmatprep.subr.mxu0 0.0
    %433 = vmatpush1.msra.mxu0 0.0
    %434 = vmatprep.subr.mxu0 0.0
    %435 = vmatpush1.msra.mxu0 0.0
    %436 = vmatprep.subr.mxu0 0.0
    %437 = vmatpush1.msra.mxu0 0.0
    %438 = vmatprep.subr.mxu0 0.0
    %439 = vmatpush1.msra.mxu0 0.0
    %440 = vmatprep.subr.mxu0 0.0
    %441 = vmatpush1.msra.mxu0 0.0
    %442 = vmatprep.subr.mxu0 0.0
    %443 = vmatpush1.msra.mxu0 0.0
    %444 = vmatprep.subr.mxu0 0.0
    %445 = vmatpush1.msra.mxu0 0.0
    %446 = vmatprep.subr.mxu0 0.0
    %447 = vmatpush1.msra.mxu0 0.0
    %448 = vmatprep.subr.mxu0 0.0
    %449 = vmatpush1.msra.mxu0 0.0
    %450 = vmatprep.subr.mxu0 0.0
    %451 = vmatpush1.msra.mxu0 0.0
    %452 = vmatprep.mubr.f32.mxu0 0.0
    %453 = vmatmul.mubr.f32.gmra.mrb[0].mxu0 %v386
    %v454 = vpop.f32.mrb[0].mxu0
    %v455 = vadd.f32 0.0, %v454
    %v456 = vpop.f32.mrb[0].mxu0
    %457 = vdwg.mxu0
    %v459 = vsel %vm384, %v383, 0
    %461 = vmatprep.subr.mxu0 0.0
    %462 = vmatpush1.msra.mxu0 %v239
    %463 = vmatprep.subr.mxu0 0.0
    %464 = vmatpush1.msra.mxu0 0.0
    %465 = vmatprep.subr.mxu0 0.0
    %466 = vmatpush1.msra.mxu0 0.0
    %467 = vmatprep.subr.mxu0 0.0
    %468 = vmatpush1.msra.mxu0 0.0
    %469 = vmatprep.subr.mxu0 0.0
    %470 = vmatpush1.msra.mxu0 0.0
    %471 = vmatprep.subr.mxu0 0.0
    %472 = vmatpush1.msra.mxu0 0.0
    %473 = vmatprep.subr.mxu0 0.0
    %474 = vmatpush1.msra.mxu0 0.0
    %475 = vmatprep.subr.mxu0 0.0
    %476 = vmatpush1.msra.mxu0 0.0
    %477 = vmatprep.subr.mxu0 0.0
    %478 = vmatpush1.msra.mxu0 0.0
    %479 = vmatprep.subr.mxu0 0.0
    %480 = vmatpush1.msra.mxu0 0.0
    %481 = vmatprep.subr.mxu0 0.0
    %482 = vmatpush1.msra.mxu0 0.0
    %483 = vmatprep.subr.mxu0 0.0
    %484 = vmatpush1.msra.mxu0 0.0
    %485 = vmatprep.subr.mxu0 0.0
    %486 = vmatpush1.msra.mxu0 0.0
    %487 = vmatprep.subr.mxu0 0.0
    %488 = vmatpush1.msra.mxu0 0.0
    %489 = vmatprep.subr.mxu0 0.0
    %490 = vmatpush1.msra.mxu0 0.0
    %491 = vmatprep.subr.mxu0 0.0
    %492 = vmatpush1.msra.mxu0 0.0
    %493 = vmatprep.subr.mxu0 0.0
    %494 = vmatpush1.msra.mxu0 0.0
    %495 = vmatprep.subr.mxu0 0.0
    %496 = vmatpush1.msra.mxu0 0.0
    %497 = vmatprep.subr.mxu0 0.0
    %498 = vmatpush1.msra.mxu0 0.0
    %499 = vmatprep.subr.mxu0 0.0
    %500 = vmatpush1.msra.mxu0 0.0
    %501 = vmatprep.subr.mxu0 0.0
    %502 = vmatpush1.msra.mxu0 0.0
    %503 = vmatprep.subr.mxu0 0.0
    %504 = vmatpush1.msra.mxu0 0.0
    %505 = vmatprep.subr.mxu0 0.0
    %506 = vmatpush1.msra.mxu0 0.0
    %507 = vmatprep.subr.mxu0 0.0
    %508 = vmatpush1.msra.mxu0 0.0
    %509 = vmatprep.subr.mxu0 0.0
    %510 = vmatpush1.msra.mxu0 0.0
    %511 = vmatprep.subr.mxu0 0.0
    %512 = vmatpush1.msra.mxu0 0.0
    %513 = vmatprep.subr.mxu0 0.0
    %514 = vmatpush1.msra.mxu0 0.0
    %515 = vmatprep.subr.mxu0 0.0
    %516 = vmatpush1.msra.mxu0 0.0
    %517 = vmatprep.subr.mxu0 0.0
    %518 = vmatpush1.msra.mxu0 0.0
    %519 = vmatprep.subr.mxu0 0.0
    %520 = vmatpush1.msra.mxu0 0.0
    %521 = vmatprep.subr.mxu0 0.0
    %522 = vmatpush1.msra.mxu0 0.0
    %523 = vmatprep.subr.mxu0 0.0
    %524 = vmatpush1.msra.mxu0 0.0
    %525 = vmatprep.mubr.f32.mxu0 0.0
    %526 = vmatmul.mubr.f32.gmra.mrb[0].mxu0 %v459
    %v527 = vpop.f32.mrb[0].mxu0
    %v528 = vadd.f32 0.0, %v527
    %v529 = vpop.f32.mrb[0].mxu0
    %530 = vdwg.mxu0
    %531 = vst [vmem:[#allocation7] sm:$0xff] %v455
    %532 = vst [vmem:[#allocation7 + $0x8] sm:$0xff] %v528
    // Predicated region
    $region18: #{tpu_custom_call.1} parent=1 // pred_check
      _
    $region19: #{tpu_custom_call.1} parent=1 // pred_check_branch
      %534 = sbr.rel (0) target = $region21
    $region20: #{tpu_custom_call.1} parent=1 // pred_region
      %s536 = ssub.s32 256, 256
      %537 = vsyncadd [#allocation4], %s536
      %s538 = sshll.u32 [#allocation7], 4
      %s539 = int_to_ptr.vmem [resolvable:$true] %s538
      %544 = dma.vmem_to_hbm [thread:$0]  %s539, 256, %s2, [#allocation4], 128, 128, 8
    $region21: #{tpu_custom_call.1} parent=1 // pred_fallthru
      _
    // Predicated region
    $region22: #{tpu_custom_call.1} parent=1 // pred_check
      _
    $region23: #{tpu_custom_call.1} parent=1 // pred_check_branch
      %546 = sbr.rel (0) target = $region25
    $region24: #{tpu_custom_call.1} parent=1 // pred_region
      %547 = dma.done [#allocation4], 256
    $region25: #{tpu_custom_call.1} parent=1 // pred_fallthru
      _
    %548 = vsyncpa [#allocation3], 1
    %549 = vsyncpa [#allocation6], 1
    %550 = vsyncpa [#allocation4], 1

</llo_original>
